<compile_context>
chip_gen: v7x
topology: tpu7x:2x2x1
jax: 0.10.0
libtpu: 0.0.40
codegen_flags: <defaults>
</compile_context>

<pallas_src>
import math

import numpy as np

import jax
import jax.numpy as jnp
from jax import lax
from jax.experimental import pallas as pl
from jax.experimental.pallas import tpu as pltpu


def _round_up(n: int, m: int) -> int:
    return (n + m - 1) // m * m


# ---------------------------------------------------------------------------
# Host-side (numpy) equivalent of Filter.kaiser_sinc_filter1d -> compile-time taps.
# ---------------------------------------------------------------------------
def kaiser_sinc_filter1d(cutoff: float, half_width: float, kernel_size: int) -> np.ndarray:
    even = kernel_size % 2 == 0
    half_size = kernel_size // 2

    delta_f = 4.0 * half_width
    A = 2.285 * (half_size - 1) * math.pi * delta_f + 7.95
    if A > 50.0:
        beta = 0.1102 * (A - 8.7)
    elif A >= 21.0:
        beta = 0.5842 * (A - 21.0) ** 0.4 + 0.07886 * (A - 21.0)
    else:
        beta = 0.0

    window = np.kaiser(kernel_size, beta)  # == torch.kaiser_window(periodic=False)

    if even:
        time = np.arange(-half_size, half_size, dtype=np.float64) + 0.5
    else:
        time = np.arange(kernel_size, dtype=np.float64) - half_size

    if cutoff == 0.0:
        filt = np.zeros_like(time)
    else:
        filt = 2.0 * cutoff * window * np.sinc(2.0 * cutoff * time)
        filt = filt / filt.sum()
    return filt.astype(np.float32)


# ---------------------------------------------------------------------------
# Pallas kernel builder.  Taps / pads / sizes are baked in as Python constants.
# ---------------------------------------------------------------------------
def _make_lpf_kernel(taps, pad_left, pad_right, t_in, t_out, fuse_padding):
    k_size = len(taps)

    def kernel(x_ref, o_ref, *scratch):
        rows = x_ref.shape[0]
        xv = x_ref[...]                                   # single aligned load of the block

        if fuse_padding:
            # Build the replicate-padded row block in VMEM scratch (no HBM pad pass).
            xp_ref = scratch[0]                           # (rows, t_in + k_size - 1)
            xp_ref[:, pad_left:pad_left + t_in] = xv
            if pad_left > 0:
                first = x_ref[:, 0:1]
                xp_ref[:, 0:pad_left] = jnp.broadcast_to(first, (rows, pad_left))
            if pad_right > 0:
                last = x_ref[:, t_in - 1:t_in]
                xp_ref[:, pad_left + t_in:pad_left + t_in + pad_right] = jnp.broadcast_to(
                    last, (rows, pad_right))
            src = xp_ref
        else:
            src = x_ref

        # Depthwise FIR: out[r, t] = sum_k w[k] * src[r, t + k].
        # Two independent accumulation chains (better VALU ILP), f32 accumulate.
        acc0 = jnp.zeros((rows, t_out), jnp.float32)
        acc1 = jnp.zeros((rows, t_out), jnp.float32)
        for k in range(0, k_size, 2):
            acc0 = acc0 + src[:, k:k + t_out].astype(jnp.float32) * taps[k]
        for k in range(1, k_size, 2):
            acc1 = acc1 + src[:, k:k + t_out].astype(jnp.float32) * taps[k]
        o_ref[...] = (acc0 + acc1).astype(o_ref.dtype)

    return kernel


# ---------------------------------------------------------------------------
# Wrapper: layout / tiling decisions in plain Python, hot path in Pallas.
# ---------------------------------------------------------------------------
def low_pass_filter1d(x, *, cutoff=0.5, half_width=0.6, stride=1, padding=True,
                      padding_mode="replicate", kernel_size=12):
    if cutoff < -0.0:
        raise ValueError("Minimum cutoff must be larger than zero.")
    if cutoff > 0.5:
        raise ValueError("A cutoff above 0.5 does not make sense.")

    B, C, T = x.shape
    even = kernel_size % 2 == 0
    pad_left = kernel_size // 2 - int(even)
    pad_right = kernel_size // 2

    # Static config -> bake taps as Python-float immediates.
    taps = tuple(float(v) for v in kaiser_sinc_filter1d(cutoff, half_width, kernel_size))

    # Replicate padding is fused into the kernel; other modes fall back to a wrapper pad.
    fuse_pad = bool(padding) and padding_mode == "replicate"
    if padding and not fuse_pad:
        mode = "edge" if padding_mode == "replicate" else padding_mode
        xw = jnp.pad(x, ((0, 0), (0, 0), (pad_left, pad_right)), mode=mode)
    else:
        xw = x

    t_in = xw.shape[-1]
    if fuse_pad:
        t_out = t_in + pad_left + pad_right - kernel_size + 1   # == t_in
    else:
        t_out = t_in - kernel_size + 1
    assert t_out >= 1, "signal too short for this kernel_size"

    rows = B * C
    x2 = xw.reshape(rows, t_in)            # free reshape; rows -> sublanes, time -> lanes

    # ---- row-tile sizing from a conservative VMEM budget (safe on v5e/v6e/v7x) ----
    itemsize = jnp.dtype(x.dtype).itemsize
    lanes = lambda n: 0 if n <= 0 else _round_up(n, 128)
    t_scr = t_in + kernel_size - 1 if fuse_pad else 0
    # 2x double-buffered input + 2x double-buffered output + 1x persistent scratch.
    bytes_per_row = (2 * lanes(t_in) + 2 * lanes(t_out) + lanes(t_scr)) * itemsize
    vmem_budget = 24 << 20
    tile_r = max(8, (min(vmem_budget // bytes_per_row, 2048) // 8) * 8)
    tile_r = min(tile_r, _round_up(rows, 8))
    if rows > 8:
        # keep >= 2 grid blocks so both of v7x's TensorCores get work
        tile_r = min(tile_r, max(8, _round_up((rows + 1) // 2, 8)))
    grid = (pl.cdiv(rows, tile_r),)        # tail row-block is masked by Pallas (no row pad)

    vmem_limit = int(min(max(tile_r * bytes_per_row + (8 << 20), 32 << 20), 48 << 20))

    kernel = _make_lpf_kernel(taps, pad_left, pad_right, t_in, t_out, fuse_pad)
    scratch_shapes = [pltpu.VMEM((tile_r, t_scr), x.dtype)] if fuse_pad else []

    out = pl.pallas_call(
        kernel,
        out_shape=jax.ShapeDtypeStruct((rows, t_out), x.dtype),
        grid_spec=pltpu.PrefetchScalarGridSpec(
            num_scalar_prefetch=0,
            grid=grid,
            in_specs=[pl.BlockSpec((tile_r, t_in), lambda i: (i, 0))],
            out_specs=pl.BlockSpec((tile_r, t_out), lambda i: (i, 0)),
            scratch_shapes=tuple(scratch_shapes),
        ),
        compiler_params=pltpu.CompilerParams(
            dimension_semantics=("parallel",),
            vmem_limit_bytes=vmem_limit,
        ),
    )(x2)

    out = out.reshape(B, C, t_out)
    if stride > 1:
        # stride-s conv == stride-1 conv subsampled by s (exact).
        out = out[:, :, ::stride]
    return out


# ---------------------------------------------------------------------------
# Pure-JAX reference (mirrors F.pad + F.conv1d(..., groups=C) semantics).
# ---------------------------------------------------------------------------
def _reference(x, *, cutoff=0.5, half_width=0.6, stride=1, padding=True,
               padding_mode="replicate", kernel_size=12):
    B, C, T = x.shape
    even = kernel_size % 2 == 0
    pad_left = kernel_size // 2 - int(even)
    pad_right = kernel_size // 2
    filt = jnp.asarray(kaiser_sinc_filter1d(cutoff, half_width, kernel_size))
    if padding:
        mode = "edge" if padding_mode == "replicate" else padding_mode
        xp = jnp.pad(x, ((0, 0), (0, 0), (pad_left, pad_right)), mode=mode)
    else:
        xp = x
    w = jnp.broadcast_to(filt.reshape(1, 1, kernel_size), (C, 1, kernel_size))
    return lax.conv_general_dilated(
        xp, w, window_strides=(stride,), padding="VALID",
        dimension_numbers=("NCH", "OIH", "NCH"), feature_group_count=C)


if __name__ == "__main__":
    key = jax.random.PRNGKey(0)
    k0, k1, k2 = jax.random.split(key, 3)

    def check(x, **kw):
        out = jax.block_until_ready(low_pass_filter1d(x, **kw))
        ref = _reference(x, **kw)
        assert out.shape == ref.shape, (out.shape, ref.shape)
        assert jnp.allclose(out, ref, atol=1e-5, rtol=1e-5), \
            float(jnp.max(jnp.abs(out - ref)))
        return out

    # 1) module defaults at a small NCL shape (B=2, C=4, T=16)
    x0 = jax.random.normal(k0, (2, 4, 16), dtype=jnp.float32)
    check(x0)

    # 2) stride > 1, row count not a multiple of the row tile (masked tail block)
    x1 = jax.random.normal(k1, (2, 6, 37), dtype=jnp.float32)
    check(x1, stride=2)

    # 3) padding=False path ("valid" depthwise FIR, no fused halo)
    x2 = jax.random.normal(k2, (2, 8, 40), dtype=jnp.float32)
    check(x2, padding=False)

    print("KERNEL_OK")
</pallas_src>

<mosaic_0001>
module attributes {stable_mosaic.version = 11 : i64} {
  func.func @kernel(%arg0: i32, %arg1: memref<8x16xf32, #tpu.memory_space<vmem>>, %arg2: memref<8x16xf32, #tpu.memory_space<vmem>>, %arg3: memref<8x27xf32, #tpu.memory_space<vmem>>) attributes {dimension_semantics = [#tpu.dimension_semantics<parallel>], iteration_bounds = array<i64: 1>, scalar_prefetch = 0 : i64, scratch_operands = 1 : i64, tpu.core_type = #tpu.core_type<tc>, window_params = [{transform_indices = @transform_0, window_bounds = array<i64: 8, 16>}, {transform_indices = @transform_1, window_bounds = array<i64: 8, 16>}]} {
    %c0 = arith.constant 0 : index
    %c0_0 = arith.constant 0 : index
    %0 = vector.load %arg1[%c0, %c0_0] : memref<8x16xf32, #tpu.memory_space<vmem>>, vector<8x16xf32>
    %c0_1 = arith.constant 0 : index
    %c5 = arith.constant 5 : index
    %1 = vector.load %arg3[%c0_1, %c5] : memref<8x27xf32, #tpu.memory_space<vmem>>, vector<8x16xf32>
    tpu.vector_store %arg3[%c0_1, %c5], %0 {strides = array<i32>} : memref<8x27xf32, #tpu.memory_space<vmem>>, vector<8x16xf32>,
    %c0_2 = arith.constant 0 : index
    %c0_3 = arith.constant 0 : index
    %2 = vector.load %arg1[%c0_2, %c0_3] : memref<8x16xf32, #tpu.memory_space<vmem>>, vector<8x1xf32>
    %3 = vector.shape_cast %2 : vector<8x1xf32> to vector<8x1xf32>
    %4 = vector.broadcast %3 : vector<8x1xf32> to vector<8x5xf32>
    %c0_4 = arith.constant 0 : index
    %c0_5 = arith.constant 0 : index
    %5 = vector.load %arg3[%c0_4, %c0_5] : memref<8x27xf32, #tpu.memory_space<vmem>>, vector<8x5xf32>
    tpu.vector_store %arg3[%c0_4, %c0_5], %4 {strides = array<i32>} : memref<8x27xf32, #tpu.memory_space<vmem>>, vector<8x5xf32>,
    %c0_6 = arith.constant 0 : index
    %c15 = arith.constant 15 : index
    %6 = vector.load %arg1[%c0_6, %c15] : memref<8x16xf32, #tpu.memory_space<vmem>>, vector<8x1xf32>
    %7 = vector.shape_cast %6 : vector<8x1xf32> to vector<8x1xf32>
    %8 = vector.broadcast %7 : vector<8x1xf32> to vector<8x6xf32>
    %c0_7 = arith.constant 0 : index
    %c21 = arith.constant 21 : index
    %9 = vector.load %arg3[%c0_7, %c21] : memref<8x27xf32, #tpu.memory_space<vmem>>, vector<8x6xf32>
    tpu.vector_store %arg3[%c0_7, %c21], %8 {strides = array<i32>} : memref<8x27xf32, #tpu.memory_space<vmem>>, vector<8x6xf32>,
    %cst = arith.constant 0.000000e+00 : f32
    %10 = vector.broadcast %cst : f32 to vector<8x16xf32>
    %cst_8 = arith.constant 0.000000e+00 : f32
    %11 = vector.broadcast %cst_8 : f32 to vector<8x16xf32>
    %c0_9 = arith.constant 0 : index
    %c0_10 = arith.constant 0 : index
    %12 = vector.load %arg3[%c0_9, %c0_10] : memref<8x27xf32, #tpu.memory_space<vmem>>, vector<8x16xf32>
    %cst_11 = arith.constant -3.5928555E-5 : f32
    %13 = vector.broadcast %cst_11 : f32 to vector<8x16xf32>
    %14 = arith.mulf %12, %13 : vector<8x16xf32>
    %15 = arith.addf %10, %14 : vector<8x16xf32>
    %c0_12 = arith.constant 0 : index
    %c2 = arith.constant 2 : index
    %16 = vector.load %arg3[%c0_12, %c2] : memref<8x27xf32, #tpu.memory_space<vmem>>, vector<8x16xf32>
    %cst_13 = arith.constant -0.0121011585 : f32
    %17 = vector.broadcast %cst_13 : f32 to vector<8x16xf32>
    %18 = arith.mulf %16, %17 : vector<8x16xf32>
    %19 = arith.addf %15, %18 : vector<8x16xf32>
    %c0_14 = arith.constant 0 : index
    %c4 = arith.constant 4 : index
    %20 = vector.load %arg3[%c0_14, %c4] : memref<8x27xf32, #tpu.memory_space<vmem>>, vector<8x16xf32>
    %cst_15 = arith.constant -0.151523769 : f32
    %21 = vector.broadcast %cst_15 : f32 to vector<8x16xf32>
    %22 = arith.mulf %20, %21 : vector<8x16xf32>
    %23 = arith.addf %19, %22 : vector<8x16xf32>
    %c0_16 = arith.constant 0 : index
    %c6 = arith.constant 6 : index
    %24 = vector.load %arg3[%c0_16, %c6] : memref<8x27xf32, #tpu.memory_space<vmem>>, vector<8x16xf32>
    %cst_17 = arith.constant 0.61359781 : f32
    %25 = vector.broadcast %cst_17 : f32 to vector<8x16xf32>
    %26 = arith.mulf %24, %25 : vector<8x16xf32>
    %27 = arith.addf %23, %26 : vector<8x16xf32>
    %c0_18 = arith.constant 0 : index
    %c8 = arith.constant 8 : index
    %28 = vector.load %arg3[%c0_18, %c8] : memref<8x27xf32, #tpu.memory_space<vmem>>, vector<8x16xf32>
    %cst_19 = arith.constant 0.0483337305 : f32
    %29 = vector.broadcast %cst_19 : f32 to vector<8x16xf32>
    %30 = arith.mulf %28, %29 : vector<8x16xf32>
    %31 = arith.addf %27, %30 : vector<8x16xf32>
    %c0_20 = arith.constant 0 : index
    %c10 = arith.constant 10 : index
    %32 = vector.load %arg3[%c0_20, %c10] : memref<8x27xf32, #tpu.memory_space<vmem>>, vector<8x16xf32>
    %cst_21 = arith.constant 0.00172930211 : f32
    %33 = vector.broadcast %cst_21 : f32 to vector<8x16xf32>
    %34 = arith.mulf %32, %33 : vector<8x16xf32>
    %35 = arith.addf %31, %34 : vector<8x16xf32>
    %c0_22 = arith.constant 0 : index
    %c1 = arith.constant 1 : index
    %36 = vector.load %arg3[%c0_22, %c1] : memref<8x27xf32, #tpu.memory_space<vmem>>, vector<8x16xf32>
    %cst_23 = arith.constant 0.00172930211 : f32
    %37 = vector.broadcast %cst_23 : f32 to vector<8x16xf32>
    %38 = arith.mulf %36, %37 : vector<8x16xf32>
    %39 = arith.addf %11, %38 : vector<8x16xf32>
    %c0_24 = arith.constant 0 : index
    %c3 = arith.constant 3 : index
    %40 = vector.load %arg3[%c0_24, %c3] : memref<8x27xf32, #tpu.memory_space<vmem>>, vector<8x16xf32>
    %cst_25 = arith.constant 0.0483337305 : f32
    %41 = vector.broadcast %cst_25 : f32 to vector<8x16xf32>
    %42 = arith.mulf %40, %41 : vector<8x16xf32>
    %43 = arith.addf %39, %42 : vector<8x16xf32>
    %c0_26 = arith.constant 0 : index
    %c5_27 = arith.constant 5 : index
    %44 = vector.load %arg3[%c0_26, %c5_27] : memref<8x27xf32, #tpu.memory_space<vmem>>, vector<8x16xf32>
    %cst_28 = arith.constant 0.61359781 : f32
    %45 = vector.broadcast %cst_28 : f32 to vector<8x16xf32>
    %46 = arith.mulf %44, %45 : vector<8x16xf32>
    %47 = arith.addf %43, %46 : vector<8x16xf32>
    %c0_29 = arith.constant 0 : index
    %c7 = arith.constant 7 : index
    %48 = vector.load %arg3[%c0_29, %c7] : memref<8x27xf32, #tpu.memory_space<vmem>>, vector<8x16xf32>
    %cst_30 = arith.constant -0.151523769 : f32
    %49 = vector.broadcast %cst_30 : f32 to vector<8x16xf32>
    %50 = arith.mulf %48, %49 : vector<8x16xf32>
    %51 = arith.addf %47, %50 : vector<8x16xf32>
    %c0_31 = arith.constant 0 : index
    %c9 = arith.constant 9 : index
    %52 = vector.load %arg3[%c0_31, %c9] : memref<8x27xf32, #tpu.memory_space<vmem>>, vector<8x16xf32>
    %cst_32 = arith.constant -0.0121011585 : f32
    %53 = vector.broadcast %cst_32 : f32 to vector<8x16xf32>
    %54 = arith.mulf %52, %53 : vector<8x16xf32>
    %55 = arith.addf %51, %54 : vector<8x16xf32>
    %c0_33 = arith.constant 0 : index
    %c11 = arith.constant 11 : index
    %56 = vector.load %arg3[%c0_33, %c11] : memref<8x27xf32, #tpu.memory_space<vmem>>, vector<8x16xf32>
    %cst_34 = arith.constant -3.5928555E-5 : f32
    %57 = vector.broadcast %cst_34 : f32 to vector<8x16xf32>
    %58 = arith.mulf %56, %57 : vector<8x16xf32>
    %59 = arith.addf %55, %58 : vector<8x16xf32>
    %60 = arith.addf %35, %59 : vector<8x16xf32>
    %c0_35 = arith.constant 0 : index
    %c0_36 = arith.constant 0 : index
    %61 = vector.load %arg2[%c0_35, %c0_36] : memref<8x16xf32, #tpu.memory_space<vmem>>, vector<8x16xf32>
    tpu.vector_store %arg2[%c0_35, %c0_36], %60 {strides = array<i32>} : memref<8x16xf32, #tpu.memory_space<vmem>>, vector<8x16xf32>,
    return
  }
  func.func @transform_0(%arg0: i32) -> (i32, i32) {
    %c0_i32 = arith.constant 0 : i32
    %c0_i32_0 = arith.constant 0 : i32
    return %arg0, %c0_i32 : i32, i32
  }
  func.func @transform_1(%arg0: i32) -> (i32, i32) {
    %c0_i32 = arith.constant 0 : i32
    %c0_i32_0 = arith.constant 0 : i32
    return %arg0, %c0_i32 : i32, i32
  }
}

</mosaic_0001>

<llo_original>
// kernel: tpu_custom_call.1
$region0: #{tpu_custom_call.1}
  #allocation0 [shape = 'u32[]', space=smem, size = 0x4, offset = 0x4, fixed_abs, tag = 'smem constant byte address 0x4 - core index']
  #allocation1 [shape = 'u32[144,128]{1,0:T(1,128)}', space=vmem, size = 0x12000, scoped, tag = 'internal scratch']
  #allocation2 [shape = 'f32[8,27]{1,0:T(8,128)}', space=vmem, size = 0x1000, scoped, tag = 'scratch operand']
  %s0 = inlined_call_operand.hbm [shape: f32[8,16], index: 0, kind: input, shape index: {}]
  %s1 = inlined_call_operand.hbm [shape: f32[8,16], index: 1, kind: output, shape index: {}]
  %s2 = sld [smem:[#allocation0]]
  $region18: #{tpu_custom_call.1} parent=0
    _
  %s4 = ssub.s32 1, %s2
  %s5 = scalar_select 0, %s4, %s2
  $region1: #{tpu_custom_call.1} parent=0
    #allocation3 [shape = 'u8[4096]{0}', space=vmem, size = 0x1000, scoped, tag = 'input window, operand 0, single buffered']
    #allocation4 [shape = 's32[1]{0}', space=sflag, size = 0x4, scoped, tag = 'scoped memory for tpu_custom_call.1']
    #allocation5 [shape = 's32[1]{0}', space=sflag, size = 0x4, scoped, tag = 'scoped memory for tpu_custom_call.1']
    #allocation6 [shape = 'u8[4096]{0}', space=vmem, size = 0x1000, scoped, tag = 'output window, operand 0, single buffered']
    %6 = vsyncpa [#allocation4], 0
    %7 = vsyncpa [#allocation5], 0
    // Predicated region
    $region2: #{tpu_custom_call.1} parent=1 // pred_check
      _
    $region3: #{tpu_custom_call.1} parent=1 // pred_check_branch
      %9 = sbr.rel (0) target = $region5
    $region4: #{tpu_custom_call.1} parent=1 // pred_region
      %s11 = ssub.s32 128, 128
      %12 = vsyncadd [#allocation4], %s11
      %s14 = sshll.u32 [#allocation3], 4
      %s15 = int_to_ptr.vmem [resolvable:$true] %s14
      %17 = dma.hbm_to_vmem [thread:$0]  %s0, 128, %s15, [#allocation4]
    $region5: #{tpu_custom_call.1} parent=1 // pred_fallthru
      _
    // Predicated region
    $region6: #{tpu_custom_call.1} parent=1 // pred_check
      _
    $region7: #{tpu_custom_call.1} parent=1 // pred_check_branch
      %19 = sbr.rel (0) target = $region9
    $region8: #{tpu_custom_call.1} parent=1 // pred_region
      %20 = dma.done [#allocation4], 128
    $region9: #{tpu_custom_call.1} parent=1 // pred_fallthru
      _
    %v21 = vld [vmem:[#allocation3] sm:$0xff]
    %23 = vrot.lane.b32.xlu0 %v21, 5
    %v24 = vpop.permute.xlu0 %23
    %vm26 = vcmask 171048
    %27 = vst.msk [vmem:[#allocation2] sm:$0xff] %vm26, %v24
    %v28 = vld [vmem:[#allocation3] sm:$0xff]
    %30 = vset.pattern.permute.xlu0 0
    %31 = vperm.xlu0 %30, %v28
    %v32 = vpop.permute.xlu0 %31
    %vm34 = vcmask 39936
    %35 = vst.msk [vmem:[#allocation2] sm:$0xff] %vm34, %v32
    %v36 = vld [vmem:[#allocation3] sm:$0xff]
    %38 = vset.pattern.permute.xlu0 15
    %39 = vperm.xlu0 %38, %v36
    %v40 = vpop.permute.xlu0 %39
    %vm42 = vcmask 220328
    %43 = vst.msk [vmem:[#allocation2] sm:$0xff] %vm42, %v40
    %v44 = vld [vmem:[#allocation2] sm:$0xff]
    %v45 = vmul.f32 %v44, -3.5928555e-05
    %v46 = vadd.f32 %v45, 0.0
    %v47 = vmul.f32 %v44, -0.0121011585
    %49 = vrot.lane.b32.xlu0 %v47, 126
    %v50 = vpop.permute.xlu0 %49
    %v52 = vadd.f32 %v46, %v50
    %v53 = vmul.f32 %v44, -0.15152377
    %55 = vrot.lane.b32.xlu0 %v53, 124
    %v56 = vpop.permute.xlu0 %55
    %v58 = vadd.f32 %v52, %v56
    %v59 = vmul.f32 %v44, 0.6135978
    %61 = vrot.lane.b32.xlu0 %v59, 122
    %v62 = vpop.permute.xlu0 %61
    %v64 = vadd.f32 %v58, %v62
    %v65 = vmul.f32 %v44, 0.04833373
    %67 = vrot.lane.b32.xlu0 %v65, 120
    %v68 = vpop.permute.xlu0 %67
    %v70 = vadd.f32 %v64, %v68
    %v71 = vmul.f32 %v44, 0.0017293021
    %73 = vrot.lane.b32.xlu0 %v71, 118
    %v74 = vpop.permute.xlu0 %73
    %v76 = vadd.f32 %v70, %v74
    %v77 = vadd.f32 %v71, 0.0
    %78 = vrot.lane.b32.xlu0 %v65, 126
    %v79 = vpop.permute.xlu0 %78
    %v81 = vadd.f32 %v77, %v79
    %82 = vrot.lane.b32.xlu0 %v59, 124
    %v83 = vpop.permute.xlu0 %82
    %v85 = vadd.f32 %v81, %v83
    %86 = vrot.lane.b32.xlu0 %v53, 122
    %v87 = vpop.permute.xlu0 %86
    %v89 = vadd.f32 %v85, %v87
    %90 = vrot.lane.b32.xlu0 %v47, 120
    %v91 = vpop.permute.xlu0 %90
    %v93 = vadd.f32 %v89, %v91
    %95 = vrot.lane.b32.xlu0 %v45, 118
    %v96 = vpop.permute.xlu0 %95
    %v98 = vadd.f32 %v93, %v96
    %100 = vrot.lane.b32.xlu0 %v98, 127
    %v101 = vpop.permute.xlu0 %100
    %v103 = vadd.f32 %v76, %v101
    %vm104 = vcmask 130048
    %105 = vst.msk [vmem:[#allocation6] sm:$0xff] %vm104, %v103
    // Predicated region
    $region10: #{tpu_custom_call.1} parent=1 // pred_check
      _
    $region11: #{tpu_custom_call.1} parent=1 // pred_check_branch
      %107 = sbr.rel (0) target = $region13
    $region12: #{tpu_custom_call.1} parent=1 // pred_region
      %s109 = ssub.s32 128, 128
      %110 = vsyncadd [#allocation5], %s109
      %s112 = sshll.u32 [#allocation6], 4
      %s113 = int_to_ptr.vmem [resolvable:$true] %s112
      %115 = dma.vmem_to_hbm [thread:$0]  %s113, 128, %s1, [#allocation5]
    $region13: #{tpu_custom_call.1} parent=1 // pred_fallthru
      _
    // Predicated region
    $region14: #{tpu_custom_call.1} parent=1 // pred_check
      _
    $region15: #{tpu_custom_call.1} parent=1 // pred_check_branch
      %117 = sbr.rel (0) target = $region17
    $region16: #{tpu_custom_call.1} parent=1 // pred_region
      %118 = dma.done [#allocation5], 128
    $region17: #{tpu_custom_call.1} parent=1 // pred_fallthru
      _
    %119 = vsyncpa [#allocation4], 1
    %120 = vsyncpa [#allocation5], 1

</llo_original>
